<compile_context>
chip_gen: v5e
topology: v5e:2x2
jax: 0.10.0
libtpu: 0.0.40
codegen_flags: <defaults>
</compile_context>

<pallas_src>
import functools

import jax
import jax.numpy as jnp
from jax.experimental import pallas as pl
from jax.experimental.pallas import tpu as pltpu


def _round_up(v, m):
    return -(-v // m) * m


def _conv_bn_relu_kernel(x_ref, xh_ref, w_ref, shift_ref, o_ref, *, offsets, tp):
    """One M-tile of the fused conv + BN(eval) + ReLU.

    x_ref:     (C_in, TP)        flattened padded-image columns of this tile
    xh_ref:    (C_in, HALO_BLK)  right halo (first columns of the next tile)
    w_ref:     (C_out_p, K)      BN-scale-folded weight, resident
    shift_ref: (C_out_p, 1)      beta + (bias - mean) * scale, f32, resident
    o_ref:     (C_out_p, TP)     lane-dense (TP % 128 == 0) f32 output tile
    """
    xcat = jnp.concatenate([x_ref[...], xh_ref[...]], axis=-1)      # (C_in, TP+HB)
    # In-VMEM im2col: K = ksize*ksize*C_in rows; one static lane-offset slice per
    # kernel tap (offsets are Python ints -> fully unrolled at trace time).
    patches = jnp.concatenate([xcat[:, off:off + tp] for off in offsets], axis=0)
    acc = jnp.dot(w_ref[...], patches, preferred_element_type=jnp.float32)
    o_ref[...] = jnp.maximum(acc + shift_ref[...], 0.0).astype(o_ref.dtype)


def _choose_tp(m_total, c_in, k, c_out_p, in_itemsize, halo_blk):
    """Pick the lane-tile size TP with honest VMEM accounting (review item 3)."""
    sub_in = _round_up(c_in, 8)
    sub_out = _round_up(c_out_p, 8)
    sub_k = _round_up(k, 8)
    per_col = (2 * sub_in * in_itemsize              # x tile, double-buffered
               + 2 * sub_out * 4                     # f32 output tile, double-buffered
               + (sub_in + sub_k + sub_out) * 4)     # xcat / patches / acc temporaries
    fixed = (2 * sub_in * halo_blk * in_itemsize                 # halo tile (2 bufs)
             + 2 * sub_out * _round_up(k, 128) * in_itemsize     # resident weight (2 bufs)
             + 2 * 8 * 128 * 4)                                  # shift column (2 bufs)
    # Conservative footprint budget: fits v7x (64 MiB/TC) and v5e/v6e once the
    # scoped limit is raised via CompilerParams(vmem_limit_bytes=...).
    budget = 24 * 1024 * 1024
    cap = max(128, (budget - fixed) // per_col // 128 * 128)
    # Aim for >= 4 grid steps when the problem is big enough: keeps the pipeline
    # overlapped and gives each v7x TensorCore >= 2 steps (review item 6).
    want = max(128, (-(-m_total // 4)) // 128 * 128)
    tp = min(cap, want)
    # The halo block's start (i+1)*TP must land on a HALO_BLK boundary.
    tp = max(halo_blk, tp // halo_blk * halo_blk)
    return tp


@functools.partial(
    jax.jit,
    static_argnames=("ksize", "padding", "stride", "dilation", "compute_dtype"))
def conv_bn_relu(x_nchw, weight, bias, gamma, beta, running_mean, running_var,
                 *, ksize, padding, stride, dilation=1, eps=1e-5,
                 compute_dtype=jnp.float32):
    """Forward pass of Conv_BN_LeakyReLU (Conv2d + BN(eval) + ReLU), NCHW in/out."""
    N, C_in, H, W = x_nchw.shape
    C_out = weight.shape[0]
    Hp, Wp = H + 2 * padding, W + 2 * padding
    H_out = (Hp - dilation * (ksize - 1) - 1) // stride + 1
    W_out = (Wp - dilation * (ksize - 1) - 1) // stride + 1

    K = ksize * ksize * C_in
    C_out_p = _round_up(C_out, 8)          # sublane pad only -> no 16x write blowup
    itemsize = jnp.dtype(compute_dtype).itemsize

    # ---- fold conv bias + BatchNorm(eval) into weight scale / channel shift ----
    scale = gamma / jnp.sqrt(running_var + eps)                      # (C_out,)
    shift = beta + (bias - running_mean) * scale                     # (C_out,)
    # (C_out, C_in, kh, kw) -> (C_out, kh, kw, C_in) -> (C_out, K); the scale is
    # folded in f32 BEFORE the compute-dtype cast (same relative rounding error
    # as casting the unscaled weight).
    w2 = jnp.transpose(weight, (0, 2, 3, 1)).reshape(C_out, K) * scale[:, None]
    w2 = jnp.pad(w2, ((0, C_out_p - C_out), (0, 0))).astype(compute_dtype)
    shift_col = jnp.pad(shift.astype(jnp.float32)[:, None],
                        ((0, C_out_p - C_out), (0, 0)))              # (C_out_p, 1)

    # ---- input: channels-major flattened padded image (C_in, N*Hp*Wp) ----------
    xpad = jnp.pad(x_nchw,
                   ((0, 0), (0, 0), (padding, padding), (padding, padding)))
    xflat = jnp.transpose(xpad, (1, 0, 2, 3)).reshape(C_in, N * Hp * Wp)
    xflat = xflat.astype(compute_dtype)

    M = N * Hp * Wp                                   # dense (stride-1) corner count
    halo = (ksize - 1) * dilation * (Wp + 1)          # max flattened tap offset
    HALO_BLK = max(128, _round_up(halo, 128))
    TP = _choose_tp(M, C_in, K, C_out_p, itemsize, HALO_BLK)
    n_tiles = -(-M // TP)
    M_pad = n_tiles * TP
    L_pad = M_pad + HALO_BLK                          # room for the last halo block
    xflat = jnp.pad(xflat, ((0, 0), (0, L_pad - M)))

    # Kernel-tap offsets in the flattened padded image; ordering matches the
    # (kh, kw, C_in) layout of w2's K axis.
    offsets = tuple(kh * dilation * Wp + kw * dilation
                    for kh in range(ksize) for kw in range(ksize))
    hb_per_tp = TP // HALO_BLK

    cost = pl.CostEstimate(
        flops=2 * M_pad * K * C_out_p,
        transcendentals=0,
        bytes_accessed=((M_pad + n_tiles * HALO_BLK) * C_in * itemsize
                        + C_out_p * K * itemsize
                        + M_pad * C_out_p * 4))

    out_flat = pl.pallas_call(
        functools.partial(_conv_bn_relu_kernel, offsets=offsets, tp=TP),
        out_shape=jax.ShapeDtypeStruct((C_out_p, M_pad), jnp.float32),
        grid=(n_tiles,),
        in_specs=[
            pl.BlockSpec((C_in, TP), lambda i: (0, i)),                # x tile
            pl.BlockSpec((C_in, HALO_BLK),
                         lambda i: (0, (i + 1) * hb_per_tp)),          # right halo
            pl.BlockSpec((C_out_p, K), lambda i: (0, 0)),              # weight (resident)
            pl.BlockSpec((C_out_p, 1), lambda i: (0, 0)),              # shift  (resident)
        ],
        out_specs=pl.BlockSpec((C_out_p, TP), lambda i: (0, i)),
        compiler_params=pltpu.CompilerParams(
            dimension_semantics=("parallel",),
            vmem_limit_bytes=48 * 1024 * 1024),
        cost_estimate=cost,
    )(xflat, xflat, w2, shift_col)

    # Valid output corner (n, ho, wo) lives at flattened position
    # p = n*Hp*Wp + (ho*stride)*Wp + wo*stride; everything else is garbage and is
    # sliced away here.  Padded channels are sliced away too.
    out = out_flat[:C_out, :M].reshape(C_out, N, Hp, Wp)
    out = out[:, :,
              0:(H_out - 1) * stride + 1:stride,
              0:(W_out - 1) * stride + 1:stride]                      # (C_out,N,Ho,Wo)
    return jnp.transpose(out, (1, 0, 2, 3)).astype(x_nchw.dtype)


def _reference(x_nchw, weight, bias, gamma, beta, running_mean, running_var,
               *, ksize, padding, stride, dilation=1, eps=1e-5):
    y = jax.lax.conv_general_dilated(
        x_nchw, weight,
        window_strides=(stride, stride),
        padding=[(padding, padding), (padding, padding)],
        rhs_dilation=(dilation, dilation),
        dimension_numbers=("NCHW", "OIHW", "NCHW"))
    y = y + bias[None, :, None, None]
    y = (y - running_mean[None, :, None, None]) / jnp.sqrt(
        running_var[None, :, None, None] + eps)
    y = y * gamma[None, :, None, None] + beta[None, :, None, None]
    return jnp.maximum(y, 0.0)


if __name__ == "__main__":
    # Module config: Conv_BN_LeakyReLU(in_channels=4, out_channels=8, ksize=3,
    #                                  padding=1, stride=1)
    N, C_in, H, W = 2, 4, 16, 16
    C_out, ksize, padding, stride, dilation = 8, 3, 1, 1, 1

    key = jax.random.PRNGKey(0)
    kx, kw, kb, kg, kbt, km, kv = jax.random.split(key, 7)

    x = jax.random.normal(kx, (N, C_in, H, W), dtype=jnp.float32)
    weight = 0.1 * jax.random.normal(kw, (C_out, C_in, ksize, ksize), dtype=jnp.float32)
    bias = 0.1 * jax.random.normal(kb, (C_out,), dtype=jnp.float32)
    gamma = 1.0 + 0.1 * jax.random.normal(kg, (C_out,), dtype=jnp.float32)
    beta = 0.1 * jax.random.normal(kbt, (C_out,), dtype=jnp.float32)
    running_mean = 0.1 * jax.random.normal(km, (C_out,), dtype=jnp.float32)
    running_var = jnp.abs(jax.random.normal(kv, (C_out,), dtype=jnp.float32)) + 0.5

    ref = _reference(x, weight, bias, gamma, beta, running_mean, running_var,
                     ksize=ksize, padding=padding, stride=stride, dilation=dilation)

    # f32-operand path: tight check against the f32 reference.
    out_f32 = conv_bn_relu(x, weight, bias, gamma, beta, running_mean, running_var,
                           ksize=ksize, padding=padding, stride=stride,
                           dilation=dilation, compute_dtype=jnp.float32)
    out_f32 = jax.block_until_ready(out_f32)
    assert out_f32.shape == (N, C_out, H, W), out_f32.shape
    assert jnp.allclose(out_f32, ref, atol=1e-4, rtol=1e-4), \
        float(jnp.max(jnp.abs(out_f32 - ref)))

    # bf16-operand path (MXU-native on v5e/v6e/v7x): f32 accumulation + f32 epilogue.
    out_bf16 = conv_bn_relu(x, weight, bias, gamma, beta, running_mean, running_var,
                            ksize=ksize, padding=padding, stride=stride,
                            dilation=dilation, compute_dtype=jnp.bfloat16)
    out_bf16 = jax.block_until_ready(out_bf16)
    assert out_bf16.shape == (N, C_out, H, W), out_bf16.shape
    assert jnp.allclose(out_bf16, ref, atol=1e-1, rtol=5e-2), \
        float(jnp.max(jnp.abs(out_bf16 - ref)))

    # Strided config (stride=2): exercises the dense-compute + strided-slice path.
    ref_s2 = _reference(x, weight, bias, gamma, beta, running_mean, running_var,
                        ksize=ksize, padding=padding, stride=2, dilation=dilation)
    out_s2 = conv_bn_relu(x, weight, bias, gamma, beta, running_mean, running_var,
                          ksize=ksize, padding=padding, stride=2,
                          dilation=dilation, compute_dtype=jnp.float32)
    out_s2 = jax.block_until_ready(out_s2)
    assert out_s2.shape == ref_s2.shape, (out_s2.shape, ref_s2.shape)
    assert jnp.allclose(out_s2, ref_s2, atol=1e-4, rtol=1e-4), \
        float(jnp.max(jnp.abs(out_s2 - ref_s2)))

    print("KERNEL_OK")
</pallas_src>

<mosaic_0001>
module attributes {stable_mosaic.version = 11 : i64} {
  func.func @_conv_bn_relu_kernel(%arg0: i32, %arg1: memref<4x128xf32, #tpu.memory_space<vmem>>, %arg2: memref<4x128xf32, #tpu.memory_space<vmem>>, %arg3: memref<8x36xf32, #tpu.memory_space<vmem>>, %arg4: memref<8x1xf32, #tpu.memory_space<vmem>>, %arg5: memref<8x128xf32, #tpu.memory_space<vmem>>) attributes {dimension_semantics = [#tpu.dimension_semantics<parallel>], iteration_bounds = array<i64: 6>, scalar_prefetch = 0 : i64, scratch_operands = 0 : i64, tpu.core_type = #tpu.core_type<tc>, window_params = [{transform_indices = @transform_0, window_bounds = array<i64: 4, 128>}, {transform_indices = @transform_1, window_bounds = array<i64: 4, 128>}, {pipeline_mode = #tpu.pipeline_mode<synchronous>, transform_indices = @transform_2, window_bounds = array<i64: 8, 36>}, {pipeline_mode = #tpu.pipeline_mode<synchronous>, transform_indices = @transform_3, window_bounds = array<i64: 8, 1>}, {transform_indices = @transform_4, window_bounds = array<i64: 8, 128>}]} {
    %c0 = arith.constant 0 : index
    %c0_0 = arith.constant 0 : index
    %0 = vector.load %arg1[%c0, %c0_0] : memref<4x128xf32, #tpu.memory_space<vmem>>, vector<4x128xf32>
    %c0_1 = arith.constant 0 : index
    %c0_2 = arith.constant 0 : index
    %1 = vector.load %arg2[%c0_1, %c0_2] : memref<4x128xf32, #tpu.memory_space<vmem>>, vector<4x128xf32>
    %2 = tpu.concatenate %0, %1 in 1 : vector<4x128xf32>, vector<4x128xf32> -> vector<4x256xf32>
    %3 = vector.extract_strided_slice %2 {offsets = [0, 0], sizes = [4, 128], strides = [1, 1]} : vector<4x256xf32> to vector<4x128xf32>
    %4 = vector.extract_strided_slice %2 {offsets = [0, 1], sizes = [4, 128], strides = [1, 1]} : vector<4x256xf32> to vector<4x128xf32>
    %5 = vector.extract_strided_slice %2 {offsets = [0, 2], sizes = [4, 128], strides = [1, 1]} : vector<4x256xf32> to vector<4x128xf32>
    %6 = vector.extract_strided_slice %2 {offsets = [0, 18], sizes = [4, 128], strides = [1, 1]} : vector<4x256xf32> to vector<4x128xf32>
    %7 = vector.extract_strided_slice %2 {offsets = [0, 19], sizes = [4, 128], strides = [1, 1]} : vector<4x256xf32> to vector<4x128xf32>
    %8 = vector.extract_strided_slice %2 {offsets = [0, 20], sizes = [4, 128], strides = [1, 1]} : vector<4x256xf32> to vector<4x128xf32>
    %9 = vector.extract_strided_slice %2 {offsets = [0, 36], sizes = [4, 128], strides = [1, 1]} : vector<4x256xf32> to vector<4x128xf32>
    %10 = vector.extract_strided_slice %2 {offsets = [0, 37], sizes = [4, 128], strides = [1, 1]} : vector<4x256xf32> to vector<4x128xf32>
    %11 = vector.extract_strided_slice %2 {offsets = [0, 38], sizes = [4, 128], strides = [1, 1]} : vector<4x256xf32> to vector<4x128xf32>
    %12 = tpu.concatenate %3, %4, %5, %6, %7, %8, %9, %10, %11 in 0 : vector<4x128xf32>, vector<4x128xf32>, vector<4x128xf32>, vector<4x128xf32>, vector<4x128xf32>, vector<4x128xf32>, vector<4x128xf32>, vector<4x128xf32>, vector<4x128xf32> -> vector<36x128xf32>
    %c0_3 = arith.constant 0 : index
    %c0_4 = arith.constant 0 : index
    %13 = vector.load %arg3[%c0_3, %c0_4] : memref<8x36xf32, #tpu.memory_space<vmem>>, vector<8x36xf32>
    %cst = arith.constant dense<0.000000e+00> : vector<8x128xf32>
    %14 = tpu.matmul %13, %12, %cst {dimension_numbers = #tpu.dot_dimension_numbers<[1], [0], [0], [1], [0, 0, 1, 1], [], []>} : vector<8x36xf32>, vector<36x128xf32>, vector<8x128xf32> -> vector<8x128xf32>
    %c0_5 = arith.constant 0 : index
    %c0_6 = arith.constant 0 : index
    %15 = vector.load %arg4[%c0_5, %c0_6] : memref<8x1xf32, #tpu.memory_space<vmem>>, vector<8x1xf32>
    %16 = vector.broadcast %15 : vector<8x1xf32> to vector<8x128xf32>
    %17 = arith.addf %14, %16 : vector<8x128xf32>
    %cst_7 = arith.constant 0.000000e+00 : f32
    %18 = vector.broadcast %cst_7 : f32 to vector<8x128xf32>
    %19 = arith.maximumf %17, %18 : vector<8x128xf32>
    %c0_8 = arith.constant 0 : index
    %c0_9 = arith.constant 0 : index
    %20 = vector.load %arg5[%c0_8, %c0_9] : memref<8x128xf32, #tpu.memory_space<vmem>>, vector<8x128xf32>
    tpu.vector_store %arg5[%c0_8, %c0_9], %19 {strides = array<i32>} : memref<8x128xf32, #tpu.memory_space<vmem>>, vector<8x128xf32>,
    return
  }
  func.func @transform_0(%arg0: i32) -> (i32, i32) {
    %c0_i32 = arith.constant 0 : i32
    %c0_i32_0 = arith.constant 0 : i32
    return %c0_i32, %arg0 : i32, i32
  }
  func.func @transform_1(%arg0: i32) -> (i32, i32) {
    %c1_i32 = arith.constant 1 : i32
    %0 = arith.addi %arg0, %c1_i32 : i32
    %c1_i32_0 = arith.constant 1 : i32
    %1 = arith.muli %0, %c1_i32_0 : i32
    %c0_i32 = arith.constant 0 : i32
    %c0_i32_1 = arith.constant 0 : i32
    return %c0_i32, %1 : i32, i32
  }
  func.func @transform_2(%arg0: i32) -> (i32, i32) {
    %c0_i32 = arith.constant 0 : i32
    %c0_i32_0 = arith.constant 0 : i32
    %c0_i32_1 = arith.constant 0 : i32
    return %c0_i32, %c0_i32_0 : i32, i32
  }
  func.func @transform_3(%arg0: i32) -> (i32, i32) {
    %c0_i32 = arith.constant 0 : i32
    %c0_i32_0 = arith.constant 0 : i32
    %c0_i32_1 = arith.constant 0 : i32
    return %c0_i32, %c0_i32_0 : i32, i32
  }
  func.func @transform_4(%arg0: i32) -> (i32, i32) {
    %c0_i32 = arith.constant 0 : i32
    %c0_i32_0 = arith.constant 0 : i32
    return %c0_i32, %arg0 : i32, i32
  }
}

</mosaic_0001>

<llo_original>
// kernel: conv_bn_relu.1
$region0: #{conv_bn_relu.1}
  #allocation0 [shape = 'u32[]', space=smem, size = 0x4, offset = 0x4, fixed_abs, tag = 'smem constant byte address 0x4 - core index']
  #allocation1 [shape = 'u32[72,128]{1,0:T(1,128)}', space=vmem, size = 0x9000, scoped, tag = 'internal scratch']
  %s0 = inlined_call_operand.vmem [shape: f32[4,896], index: 0, kind: input, shape index: {}, may-alias: {0,1}]
  %s1 = inlined_call_operand.vmem [shape: f32[4,896], index: 1, kind: input, shape index: {}, may-alias: {0,1}]
  %s2 = inlined_call_operand.vmem [shape: f32[8,36], index: 2, kind: input, shape index: {}]
  %s3 = inlined_call_operand.vmem [shape: f32[8,1], index: 3, kind: input, shape index: {}]
  %s4 = inlined_call_operand.vmem [shape: f32[8,768], index: 4, kind: output, shape index: {}]
  %s5 = sld [smem:[#allocation0]]
  $region49: #{conv_bn_relu.1} parent=0
    _
  %s7 = ssub.s32 1, %s5
  %s8 = scalar_select 0, %s7, %s5
  loop: start=0, step=1, limit=8
  $region2: #{conv_bn_relu.1} parent=0 // loop_pre_header
    _
  $region3: #{conv_bn_relu.1} parent=0 // loop_header
    %s10 = sphi 0, %s14
    %p11 = scmp.ge.s32.totalorder %s10, 8
    %s20 = sphi 0, %s22
    %s23 = sphi 0, %s20
    %s24 = sphi 0, %s23
    %s40 = sphi 0, %s24
    %s48 = sphi 0, %s50
    %s51 = sphi 0, %s48
    %s52 = sphi 0, %s51
    %s68 = sphi 0, %s52
    %s72 = sphi 0, %s72
    %s74 = sphi 0, %s72
    %s75 = sphi 0, %s74
    %s89 = sphi 0, %s75
    %s93 = sphi 0, %s93
    %s95 = sphi 0, %s93
    %s96 = sphi 0, %s95
    %s110 = sphi 0, %s96
    %s116 = sphi 0, %s118
    %s119 = sphi 0, %s116
    %s120 = sphi 0, %s119
    %s136 = sphi 0, %s120
  $region4: #{conv_bn_relu.1} parent=0 // loop_header_branch
    %13 = sbr.rel (%p11) target = $region8
  $region5: #{conv_bn_relu.1} parent=0 // loop_body
    %s15 = ssub.s32 %s10, 1
    %s16 = ssub.s32 %s10, 2
    %s17 = sadd.s32 %s10, 1
    %s18 = ssub.s32 %s10, %s17
    %p19 = scmp.eq.s32.totalorder %s18, 0
    %s21 = sadd.s32 %s20, 1
    %s22 = scalar_select %p19, %s20, %s21
    %p25 = pneg %p19
    %p26 = scmp.eq.s32.totalorder %s10, 5
    %p27 = por %p25, %p26
    %p28 = scmp.ne.s32.totalorder %s20, %s23
    %p29 = scmp.eq.s32.totalorder %s10, 0
    %p30 = por %p28, %p29
    %p31 = scmp.ne.s32.totalorder %s20, %s23
    %p32 = scmp.eq.s32.totalorder %s15, 5
    %p33 = por %p31, %p32
    %p34 = scmp.ne.s32.totalorder %s23, %s24
    %p35 = scmp.eq.s32.totalorder %s15, 0
    %p36 = por %p34, %p35
    %p37 = scmp.ne.s32.totalorder %s23, %s24
    %p38 = scmp.eq.s32.totalorder %s16, 5
    %p39 = por %p37, %p38
    %p41 = scmp.ne.s32.totalorder %s24, %s40
    %p42 = scmp.eq.s32.totalorder %s16, 0
    %p43 = por %p41, %p42
    %s44 = sadd.s32 %s10, 1
    %s45 = sadd.s32 %s17, 1
    %s46 = ssub.s32 %s44, %s45
    %p47 = scmp.eq.s32.totalorder %s46, 0
    %s49 = sadd.s32 %s48, 1
    %s50 = scalar_select %p47, %s48, %s49
    %p53 = pneg %p47
    %p54 = scmp.eq.s32.totalorder %s10, 5
    %p55 = por %p53, %p54
    %p56 = scmp.ne.s32.totalorder %s48, %s51
    %p57 = scmp.eq.s32.totalorder %s10, 0
    %p58 = por %p56, %p57
    %p59 = scmp.ne.s32.totalorder %s48, %s51
    %p60 = scmp.eq.s32.totalorder %s15, 5
    %p61 = por %p59, %p60
    %p62 = scmp.ne.s32.totalorder %s51, %s52
    %p63 = scmp.eq.s32.totalorder %s15, 0
    %p64 = por %p62, %p63
    %p65 = scmp.ne.s32.totalorder %s51, %s52
    %p66 = scmp.eq.s32.totalorder %s16, 5
    %p67 = por %p65, %p66
    %p69 = scmp.ne.s32.totalorder %s52, %s68
    %p70 = scmp.eq.s32.totalorder %s16, 0
    %p71 = por %p69, %p70
    %s73 = sadd.s32 %s72, 1
    %p76 = scmp.eq.s32.totalorder %s10, 5
    %p77 = scmp.ne.s32.totalorder %s72, %s74
    %p78 = scmp.eq.s32.totalorder %s10, 0
    %p79 = por %p77, %p78
    %p80 = scmp.ne.s32.totalorder %s72, %s74
    %p81 = scmp.eq.s32.totalorder %s15, 5
    %p82 = por %p80, %p81
    %p83 = scmp.ne.s32.totalorder %s74, %s75
    %p84 = scmp.eq.s32.totalorder %s15, 0
    %p85 = por %p83, %p84
    %p86 = scmp.ne.s32.totalorder %s74, %s75
    %p87 = scmp.eq.s32.totalorder %s16, 5
    %p88 = por %p86, %p87
    %p90 = scmp.ne.s32.totalorder %s75, %s89
    %p91 = scmp.eq.s32.totalorder %s16, 0
    %p92 = por %p90, %p91
    %s94 = sadd.s32 %s93, 1
    %p97 = scmp.eq.s32.totalorder %s10, 5
    %p98 = scmp.ne.s32.totalorder %s93, %s95
    %p99 = scmp.eq.s32.totalorder %s10, 0
    %p100 = por %p98, %p99
    %p101 = scmp.ne.s32.totalorder %s93, %s95
    %p102 = scmp.eq.s32.totalorder %s15, 5
    %p103 = por %p101, %p102
    %p104 = scmp.ne.s32.totalorder %s95, %s96
    %p105 = scmp.eq.s32.totalorder %s15, 0
    %p106 = por %p104, %p105
    %p107 = scmp.ne.s32.totalorder %s95, %s96
    %p108 = scmp.eq.s32.totalorder %s16, 5
    %p109 = por %p107, %p108
    %p111 = scmp.ne.s32.totalorder %s96, %s110
    %p112 = scmp.eq.s32.totalorder %s16, 0
    %p113 = por %p111, %p112
    %s114 = ssub.s32 %s10, %s17
    %p115 = scmp.eq.s32.totalorder %s114, 0
    %s117 = sadd.s32 %s116, 1
    %s118 = scalar_select %p115, %s116, %s117
    %p121 = pneg %p115
    %p122 = scmp.eq.s32.totalorder %s10, 5
    %p123 = por %p121, %p122
    %p124 = scmp.ne.s32.totalorder %s116, %s119
    %p125 = scmp.eq.s32.totalorder %s10, 0
    %p126 = por %p124, %p125
    %p127 = scmp.ne.s32.totalorder %s116, %s119
    %p128 = scmp.eq.s32.totalorder %s15, 5
    %p129 = por %p127, %p128
    %p130 = scmp.ne.s32.totalorder %s119, %s120
    %p131 = scmp.eq.s32.totalorder %s15, 0
    %p132 = por %p130, %p131
    %p133 = scmp.ne.s32.totalorder %s119, %s120
    %p134 = scmp.eq.s32.totalorder %s16, 5
    %p135 = por %p133, %p134
    %p137 = scmp.ne.s32.totalorder %s120, %s136
    %p138 = scmp.eq.s32.totalorder %s16, 0
    %p139 = por %p137, %p138
    %p140 = scmp.le.s32.totalorder 1, %s10
    %p141 = scmp.lt.s32.totalorder %s10, 7
    %p142 = pnand %p140, %p141
    %p143 = pneg %p142
    // Predicated region
    $region9: #{conv_bn_relu.1} parent=5 // pred_check
      _
    $region10: #{conv_bn_relu.1} parent=5 // pred_check_branch
      %145 = sbr.rel (%p142) target = $region12
    $region11: #{conv_bn_relu.1} parent=5 // pred_region
      %s146 = ssub.s32 %s10, 1
      // Predicated region
      $region13: #{conv_bn_relu.1} parent=11 // pred_check
        %p147 = pneg %p85
      $region14: #{conv_bn_relu.1} parent=11 // pred_check_branch
        %149 = sbr.rel (%p147) target = $region16
      $region15: #{conv_bn_relu.1} parent=11 // pred_region
        _
      $region16: #{conv_bn_relu.1} parent=11 // pred_fallthru
        _
      // Predicated region
      $region17: #{conv_bn_relu.1} parent=11 // pred_check
        %p150 = pneg %p106
      $region18: #{conv_bn_relu.1} parent=11 // pred_check_branch
        %152 = sbr.rel (%p150) target = $region20
      $region19: #{conv_bn_relu.1} parent=11 // pred_region
        _
      $region20: #{conv_bn_relu.1} parent=11 // pred_fallthru
        _
    $region12: #{conv_bn_relu.1} parent=5 // pred_fallthru
      _
    %p153 = scmp.lt.s32.totalorder %s10, 6
    // Predicated region
    $region21: #{conv_bn_relu.1} parent=5 // pred_check
      %p154 = pneg %p153
    $region22: #{conv_bn_relu.1} parent=5 // pred_check_branch
      %156 = sbr.rel (%p154) target = $region24
    $region23: #{conv_bn_relu.1} parent=5 // pred_region
      // Predicated region
      $region25: #{conv_bn_relu.1} parent=23 // pred_check
        %p157 = pneg %p30
      $region26: #{conv_bn_relu.1} parent=23 // pred_check_branch
        %159 = sbr.rel (%p157) target = $region28
      $region27: #{conv_bn_relu.1} parent=23 // pred_region
        %p160 = scmp.lt.s32.totalorder %s10, 6
        %s161 = scalar_select %p160, %s10, 6
        %s162 = smul.addr %s161, 4
        %s163 = scalar_lea.vmem %s0, %s162
      $region28: #{conv_bn_relu.1} parent=23 // pred_fallthru
        _
      // Predicated region
      $region29: #{conv_bn_relu.1} parent=23 // pred_check
        %p164 = pneg %p58
      $region30: #{conv_bn_relu.1} parent=23 // pred_check_branch
        %166 = sbr.rel (%p164) target = $region32
      $region31: #{conv_bn_relu.1} parent=23 // pred_region
        %s167 = sadd.s32 %s10, 1
        %p168 = scmp.lt.s32.totalorder %s167, 6
        %s169 = scalar_select %p168, %s167, 6
        %s170 = smul.addr %s169, 4
        %s171 = scalar_lea.vmem %s1, %s170
        %s172 = sadd.s32 %s10, 1
      $region32: #{conv_bn_relu.1} parent=23 // pred_fallthru
        _
    $region24: #{conv_bn_relu.1} parent=5 // pred_fallthru
      _
    %p173 = scmp.le.s32.totalorder 1, %s10
    %p174 = scmp.lt.s32.totalorder %s10, 7
    %p175 = pnand %p173, %p174
    %p176 = pneg %p175
    // Predicated region
    $region33: #{conv_bn_relu.1} parent=5 // pred_check
      _
    $region34: #{conv_bn_relu.1} parent=5 // pred_check_branch
      %178 = sbr.rel (%p175) target = $region36
    $region35: #{conv_bn_relu.1} parent=5 // pred_region
      %s179 = ssub.s32 %s10, 1
      %p180 = scmp.lt.s32.totalorder %s15, 6
      %s181 = scalar_select %p180, %s15, 6
      %s182 = smul.addr %s181, 4
      %s183 = scalar_lea.vmem %s0, %s182
      %p184 = pneg %p36
      %p185 = pneg %p33
      %s186 = sadd.s32 %s15, 1
      %p187 = scmp.lt.s32.totalorder %s186, 6
      %s188 = scalar_select %p187, %s186, 6
      %s189 = smul.addr %s188, 4
      %s190 = scalar_lea.vmem %s1, %s189
      %p191 = pneg %p64
      %p192 = pneg %p61
      %p193 = pneg %p85
      %p194 = pneg %p82
      %p195 = pneg %p106
      %p196 = pneg %p103
      %p197 = pneg %p132
      %p198 = pneg %p129
      %p199 = scmp.lt.s32.totalorder %s15, 5
      %s200 = scalar_select %p199, %s15, 5
      %s201 = smul.addr %s200, 8
      %s202 = scalar_lea.vmem %s4, %s201
      %p203 = scmp.lt.s32.totalorder %s15, 6
      %s204 = scalar_select %p203, %s15, 6
      %s205 = smul.addr %s204, 4
      %s206 = scalar_lea.vmem %s0, %s205
      %s207 = sadd.s32 %s15, 1
      %p208 = scmp.lt.s32.totalorder %s207, 6
      %s209 = scalar_select %p208, %s207, 6
      %s210 = smul.addr %s209, 4
      %s211 = scalar_lea.vmem %s1, %s210
      %s212 = sadd.s32 %s15, 1
      %p213 = scmp.lt.s32.totalorder %s15, 5
      %s214 = scalar_select %p213, %s15, 5
      %s215 = smul.addr %s214, 8
      %s216 = scalar_lea.vmem %s4, %s215
      %v217 = vld [vmem:[%s206] sm:$0xf]
      %v218 = vld [vmem:[%s211] sm:$0xf]
      %v221 = vrot.slane %v217, 4
      %v222 = vrot.slane %v218, 4
      %223 = vrot.lane.b32.xlu0 %v221, 127
      %v224 = vpop.permute.xlu0 %223
      %225 = vrot.lane.b32.xlu0 %v222, 127
      %v226 = vpop.permute.xlu0 %225
      %vm227 = vcmask 1039360
      %v228 = vsel %vm227, %v224, %v226
      %230 = vrot.lane.b32.xlu0 %v217, 126
      %v231 = vpop.permute.xlu0 %230
      %232 = vrot.lane.b32.xlu0 %v218, 126
      %v233 = vpop.permute.xlu0 %232
      %vm234 = vcmask 1031168
      %v235 = vsel %vm234, %v231, %v233
      %237 = vrot.lane.b32.xlu0 %v221, 110
      %v238 = vpop.permute.xlu0 %237
      %239 = vrot.lane.b32.xlu0 %v222, 110
      %v240 = vpop.permute.xlu0 %239
      %vm241 = vcmask 900096
      %v242 = vsel %vm241, %v238, %v240
      %244 = vrot.lane.b32.xlu0 %v217, 109
      %v245 = vpop.permute.xlu0 %244
      %246 = vrot.lane.b32.xlu0 %v218, 109
      %v247 = vpop.permute.xlu0 %246
      %vm248 = vcmask 891904
      %v249 = vsel %vm248, %v245, %v247
      %251 = vrot.lane.b32.xlu0 %v221, 108
      %v252 = vpop.permute.xlu0 %251
      %253 = vrot.lane.b32.xlu0 %v222, 108
      %v254 = vpop.permute.xlu0 %253
      %vm255 = vcmask 883712
      %v256 = vsel %vm255, %v252, %v254
      %258 = vrot.lane.b32.xlu0 %v217, 92
      %v259 = vpop.permute.xlu0 %258
      %260 = vrot.lane.b32.xlu0 %v218, 92
      %v261 = vpop.permute.xlu0 %260
      %vm262 = vcmask 752640
      %v263 = vsel %vm262, %v259, %v261
      %265 = vrot.lane.b32.xlu0 %v221, 91
      %v266 = vpop.permute.xlu0 %265
      %267 = vrot.lane.b32.xlu0 %v222, 91
      %v268 = vpop.permute.xlu0 %267
      %vm269 = vcmask 744448
      %v270 = vsel %vm269, %v266, %v268
      %272 = vrot.lane.b32.xlu0 %v217, 90
      %v273 = vpop.permute.xlu0 %272
      %274 = vrot.lane.b32.xlu0 %v218, 90
      %v275 = vpop.permute.xlu0 %274
      %vm276 = vcmask 736256
      %v277 = vsel %vm276, %v273, %v275
      %vm278 = vcmask 1043456
      %v279 = vsel %vm278, %v217, %v228
      %v280 = vsel %vm278, %v235, %v242
      %v281 = vsel %vm278, %v249, %v256
      %v282 = vsel %vm278, %v263, %v270
      %v283 = vld [vmem:[%s2] sm:$0xff]
      %v284 = vld [vmem:[%s3] sm:$0xff]
      %286 = vset.pattern.permute.xlu0 0
      %287 = vperm.xlu0 %286, %v284
      %v288 = vpop.permute.xlu0 %287
      %vm290 = vcmask 293888
      %v292 = vsel %vm290, %v283, 0
      %v294 = vsel %vm278, %v277, 0
      %296 = vmatpush.msra.mxu0 0.0
      %297 = vmatpush.msra.mxu0 0.0
      %298 = vmatpush.msra.mxu0 0.0
      %299 = vmatpush.msra.mxu0 0.0
      %300 = vmatpush.msra.mxu0 0.0
      %301 = vmatpush.msra.mxu0 0.0
      %302 = vmatpush.msra.mxu0 0.0
      %303 = vmatpush.msra.mxu0 0.0
      %304 = vmatpush.msra.mxu0 0.0
      %305 = vmatpush.msra.mxu0 0.0
      %306 = vmatpush.msra.mxu0 0.0
      %307 = vmatpush.msra.mxu0 %v294
      %308 = vmatpush.msra.mxu0 %v282
      %309 = vmatpush.msra.mxu0 %v281
      %310 = vmatpush.msra.mxu0 %v280
      %311 = vmatpush.msra.mxu0 %v279
      %312 = vmatmul.f32.gmra.mxu0 %v292
      %v313 = vpop.f32.mrf.mxu0
      %v314 = vadd.f32 %v288, %v313
      %315 = vdwg.mxu0
      %v316 = vmax.f32 %v314, 0.0
      %317 = vst [vmem:[%s216] sm:$0xff] %v316
      %p318 = scmp.lt.s32.totalorder %s15, 5
      %s319 = scalar_select %p318, %s15, 5
      %s320 = smul.addr %s319, 8
      %s321 = scalar_lea.vmem %s4, %s320
      // Predicated region
      $region37: #{conv_bn_relu.1} parent=35 // pred_check
        %p322 = pneg %p129
      $region38: #{conv_bn_relu.1} parent=35 // pred_check_branch
        %324 = sbr.rel (%p322) target = $region40
      $region39: #{conv_bn_relu.1} parent=35 // pred_region
        _
      $region40: #{conv_bn_relu.1} parent=35 // pred_fallthru
        _
    $region36: #{conv_bn_relu.1} parent=5 // pred_fallthru
      _
    %p325 = scmp.le.s32.totalorder 2, %s10
    // Predicated region
    $region41: #{conv_bn_relu.1} parent=5 // pred_check
      %p326 = pneg %p325
    $region42: #{conv_bn_relu.1} parent=5 // pred_check_branch
      %328 = sbr.rel (%p326) target = $region44
    $region43: #{conv_bn_relu.1} parent=5 // pred_region
      %s329 = ssub.s32 %s10, 2
      // Predicated region
      $region45: #{conv_bn_relu.1} parent=43 // pred_check
        %p330 = pneg %p135
      $region46: #{conv_bn_relu.1} parent=43 // pred_check_branch
        %332 = sbr.rel (%p330) target = $region48
      $region47: #{conv_bn_relu.1} parent=43 // pred_region
        %p333 = scmp.lt.s32.totalorder %s16, 5
        %s334 = scalar_select %p333, %s16, 5
        %s335 = smul.addr %s334, 8
        %s336 = scalar_lea.vmem %s4, %s335
      $region48: #{conv_bn_relu.1} parent=43 // pred_fallthru
        _
    $region44: #{conv_bn_relu.1} parent=5 // pred_fallthru
      _
  $region6: #{conv_bn_relu.1} parent=0 // loop_footer
    %s14 = sadd.s32 1, %s10
  $region7: #{conv_bn_relu.1} parent=0 // loop_footer_branch
    %9 = sbr.rel target = $region3
  $region8: #{conv_bn_relu.1} parent=0 // loop_exit
    _

</llo_original>
